<compile_context>
chip_gen: v5e
topology: v5e:2x2
jax: 0.10.0
libtpu: 0.0.40
codegen_flags: <defaults>
</compile_context>

<pallas_src>
import functools

import jax
import jax.numpy as jnp
from jax import lax
from jax.experimental import pallas as pl
from jax.experimental.pallas import tpu as pltpu

LANE = 128  # TPU vreg lane width


def head_kernel(x_ref, wqkv_ref, o_ref, *, B, T, head_size, hs_pad):
    # x_ref:    (B*T, C)        flattened batch of token embeddings
    # wqkv_ref: (C, 3*hs_pad)   packed [Wq^T | Wk^T | Wv^T], each zero-padded to hs_pad lanes
    # o_ref:    (B*T, hs_pad)   lane-dense (128-wide) output; wrapper slices [:, :head_size]
    scale = 1.0 / (head_size ** 0.5)

    # Single fused QKV projection on the MXU.
    qkv = jnp.dot(x_ref[...], wqkv_ref[...], preferred_element_type=jnp.float32)
    # 128-lane-aligned slices: free (no intra-vreg lane shifts).
    q = qkv[:, 0 * hs_pad:1 * hs_pad] * scale   # fold 1/sqrt(hs) into q (B*T*hs elems)
    k = qkv[:, 1 * hs_pad:2 * hs_pad]
    v = qkv[:, 2 * hs_pad:3 * hs_pad]

    # Causal (tril) mask: row i may attend to columns j <= i.
    row = lax.broadcasted_iota(jnp.int32, (T, T), 0)
    col = lax.broadcasted_iota(jnp.int32, (T, T), 1)
    causal = row >= col
    neg_big = jnp.float32(-1e30)   # finite "-inf": exact after softmax, NaN-safe

    # B is tiny and static -> unrolled loop.  With T a multiple of 8 every
    # q/k/v slice is a whole (8,128)-tile sublane slice (no relayout copies).
    outs = []
    for b in range(B):
        lo, hi = b * T, (b + 1) * T
        qb = q[lo:hi]
        kb = k[lo:hi]
        vb = v[lo:hi]

        # (T, hs_pad) x (T, hs_pad) contracting on last dims -> (T, T); no explicit k.T.
        # Zero-padded K columns contribute nothing, so this equals the true q.k^T.
        wei = lax.dot_general(qb, kb, (((1,), (1,)), ((), ())),
                              preferred_element_type=jnp.float32)
        wei = jnp.where(causal, wei, neg_big)

        # Numerically-stable softmax over keys (exact reciprocal for f32 parity).
        m = jnp.max(wei, axis=-1, keepdims=True)
        e = jnp.exp(wei - m)
        denom = jnp.sum(e, axis=-1, keepdims=True)
        p = e * pl.reciprocal(denom, approx=False)

        # (T, T) @ (T, hs_pad) -> (T, hs_pad); padded V columns give zero output
        # columns, i.e. the lane-dense padded output comes for free.
        outs.append(jnp.dot(p, vb, preferred_element_type=jnp.float32))

    # One unmasked full-tile store instead of B partial stores.
    out_all = jnp.concatenate(outs, axis=0) if B > 1 else outs[0]
    o_ref[...] = out_all.astype(o_ref.dtype)


def pack_qkv_weights(wq, wk, wv):
    """Pack [Wq^T | Wk^T | Wv^T] with each block zero-padded to a 128-lane boundary.

    Weights are static: call this ONCE (hoisted out of the per-call forward path).
    wq/wk/wv: (head_size, C) in nn.Linear (out, in) layout.
    Returns (w_qkv: (C, 3*hs_pad), hs_pad: int).
    """
    hs, _ = wq.shape
    hs_pad = pl.cdiv(hs, LANE) * LANE

    def pad_t(w):
        wt = w.T                                        # (C, hs)
        return jnp.pad(wt, ((0, 0), (0, hs_pad - hs)))  # (C, hs_pad), zero-padded

    w_qkv = jnp.concatenate([pad_t(wq), pad_t(wk), pad_t(wv)], axis=1)
    return w_qkv, hs_pad


@functools.partial(jax.jit, static_argnames=("head_size", "hs_pad"))
def head_forward(x, w_qkv, *, head_size, hs_pad):
    """x: (B, T, C); w_qkv: (C, 3*hs_pad) from pack_qkv_weights (precomputed once)."""
    B, T, C = x.shape
    x_flat = x.reshape(B * T, C)

    cost = pl.CostEstimate(
        flops=2 * B * T * C * 3 * hs_pad + B * 4 * T * T * hs_pad,
        transcendentals=B * T * T,
        bytes_accessed=4 * (B * T * C + C * 3 * hs_pad + B * T * hs_pad),
    )

    out_pad = pl.pallas_call(
        functools.partial(head_kernel, B=B, T=T, head_size=head_size, hs_pad=hs_pad),
        out_shape=jax.ShapeDtypeStruct((B * T, hs_pad), x.dtype),
        in_specs=[pl.BlockSpec(memory_space=pltpu.MemorySpace.VMEM),
                  pl.BlockSpec(memory_space=pltpu.MemorySpace.VMEM)],
        out_specs=pl.BlockSpec(memory_space=pltpu.MemorySpace.VMEM),
        cost_estimate=cost,
    )(x_flat, w_qkv)

    # Lane-dense kernel output; drop the zero-padded head columns here.
    return out_pad[:, :head_size].reshape(B, T, head_size)


def reference(x, wq, wk, wv, *, head_size):
    # Pure-JAX re-implementation of Head.forward (inference mode).
    B, T, C = x.shape
    k = x @ wk.T
    q = x @ wq.T
    v = x @ wv.T
    wei = jnp.einsum('btd,bsd->bts', q, k) / (head_size ** 0.5)
    causal = jnp.tril(jnp.ones((T, T), dtype=bool))
    wei = jnp.where(causal[None], wei, -jnp.inf)
    p = jax.nn.softmax(wei, axis=-1)
    return p @ v


if __name__ == "__main__":
    # Small shapes consistent with the module.
    B, T = 2, 8
    embed_size = 32
    head_size = 8
    block_size = 16           # tril buffer size >= T; only T x T is ever used

    key = jax.random.PRNGKey(0)
    kx, kq, kk, kv = jax.random.split(key, 4)

    x = jax.random.normal(kx, (B, T, embed_size), dtype=jnp.float32)
    # nn.Linear weight layout: (out_features, in_features)
    wq = jax.random.normal(kq, (head_size, embed_size), jnp.float32) * 0.1
    wk = jax.random.normal(kk, (head_size, embed_size), jnp.float32) * 0.1
    wv = jax.random.normal(kv, (head_size, embed_size), jnp.float32) * 0.1

    # Weight repack/pad done ONCE (weights are static), not per forward call.
    w_qkv, hs_pad = pack_qkv_weights(wq, wk, wv)
    w_qkv = jax.block_until_ready(w_qkv)

    out = head_forward(x, w_qkv, head_size=head_size, hs_pad=hs_pad)
    out = jax.block_until_ready(out)

    ref = reference(x, wq, wk, wv, head_size=head_size)
    assert out.shape == (B, T, head_size)
    assert jnp.allclose(out, ref, atol=1e-5, rtol=1e-5), \
        f"max abs err = {jnp.max(jnp.abs(out - ref))}"

    print("KERNEL_OK")
</pallas_src>

<mosaic_0001>
module attributes {stable_mosaic.version = 11 : i64} {
  func.func @head_kernel(%arg0: memref<16x32xf32, #tpu.memory_space<vmem>>, %arg1: memref<32x384xf32, #tpu.memory_space<vmem>>, %arg2: memref<16x128xf32, #tpu.memory_space<vmem>>) attributes {dimension_semantics = [], scalar_prefetch = 0 : i64, scratch_operands = 0 : i64, tpu.core_type = #tpu.core_type<tc>} {
    %c0 = arith.constant 0 : index
    %c0_0 = arith.constant 0 : index
    %0 = vector.load %arg0[%c0, %c0_0] : memref<16x32xf32, #tpu.memory_space<vmem>>, vector<16x32xf32>
    %c0_1 = arith.constant 0 : index
    %c0_2 = arith.constant 0 : index
    %1 = vector.load %arg1[%c0_1, %c0_2] : memref<32x384xf32, #tpu.memory_space<vmem>>, vector<32x384xf32>
    %cst = arith.constant dense<0.000000e+00> : vector<16x384xf32>
    %2 = tpu.matmul %0, %1, %cst {dimension_numbers = #tpu.dot_dimension_numbers<[1], [0], [0], [1], [0, 0, 1, 1], [], []>} : vector<16x32xf32>, vector<32x384xf32>, vector<16x384xf32> -> vector<16x384xf32>
    %3 = vector.extract_strided_slice %2 {offsets = [0, 0], sizes = [16, 128], strides = [1, 1]} : vector<16x384xf32> to vector<16x128xf32>
    %cst_3 = arith.constant 0.353553385 : f32
    %4 = vector.broadcast %cst_3 : f32 to vector<16x128xf32>
    %5 = arith.mulf %3, %4 : vector<16x128xf32>
    %6 = vector.extract_strided_slice %2 {offsets = [0, 128], sizes = [16, 128], strides = [1, 1]} : vector<16x384xf32> to vector<16x128xf32>
    %7 = vector.extract_strided_slice %2 {offsets = [0, 256], sizes = [16, 128], strides = [1, 1]} : vector<16x384xf32> to vector<16x128xf32>
    %8 = tpu.iota {dimensions = array<i32: 0>} : vector<8x8xi32>
    %9 = tpu.iota {dimensions = array<i32: 1>} : vector<8x8xi32>
    %10 = arith.cmpi sge, %8, %9 : vector<8x8xi32>
    %11 = vector.extract_strided_slice %5 {offsets = [0, 0], sizes = [8, 128], strides = [1, 1]} : vector<16x128xf32> to vector<8x128xf32>
    %12 = vector.extract_strided_slice %6 {offsets = [0, 0], sizes = [8, 128], strides = [1, 1]} : vector<16x128xf32> to vector<8x128xf32>
    %13 = vector.extract_strided_slice %7 {offsets = [0, 0], sizes = [8, 128], strides = [1, 1]} : vector<16x128xf32> to vector<8x128xf32>
    %cst_4 = arith.constant dense<0.000000e+00> : vector<8x8xf32>
    %14 = tpu.matmul %11, %12, %cst_4 {dimension_numbers = #tpu.dot_dimension_numbers<[1], [1], [0], [0], [0, 0, 1, 0], [], []>} : vector<8x128xf32>, vector<8x128xf32>, vector<8x8xf32> -> vector<8x8xf32>
    %cst_5 = arith.constant -1.000000e+30 : f32
    %15 = vector.broadcast %cst_5 : f32 to vector<8x8xf32>
    %16 = arith.select %10, %14, %15 : vector<8x8xi1>, vector<8x8xf32>
    %cst_6 = arith.constant dense<0xFF800000> : vector<8xf32>
    %17 = vector.multi_reduction <maximumf>, %16, %cst_6 [1] : vector<8x8xf32> to vector<8xf32>
    %18 = vector.shape_cast %17 : vector<8xf32> to vector<8x1xf32>
    %19 = vector.broadcast %18 : vector<8x1xf32> to vector<8x8xf32>
    %20 = arith.subf %16, %19 : vector<8x8xf32>
    %21 = math.exp %20 : vector<8x8xf32>
    %cst_7 = arith.constant dense<0.000000e+00> : vector<8xf32>
    %22 = vector.multi_reduction <add>, %21, %cst_7 [1] : vector<8x8xf32> to vector<8xf32>
    %23 = vector.shape_cast %22 : vector<8xf32> to vector<8x1xf32>
    %24 = tpu.reciprocal %23 : vector<8x1xf32> -> vector<8x1xf32>
    %25 = vector.broadcast %24 : vector<8x1xf32> to vector<8x8xf32>
    %26 = arith.mulf %21, %25 : vector<8x8xf32>
    %cst_8 = arith.constant dense<0.000000e+00> : vector<8x128xf32>
    %27 = tpu.matmul %26, %13, %cst_8 {dimension_numbers = #tpu.dot_dimension_numbers<[1], [0], [0], [1], [0, 0, 1, 1], [], []>} : vector<8x8xf32>, vector<8x128xf32>, vector<8x128xf32> -> vector<8x128xf32>
    %28 = vector.extract_strided_slice %5 {offsets = [8, 0], sizes = [8, 128], strides = [1, 1]} : vector<16x128xf32> to vector<8x128xf32>
    %29 = vector.extract_strided_slice %6 {offsets = [8, 0], sizes = [8, 128], strides = [1, 1]} : vector<16x128xf32> to vector<8x128xf32>
    %30 = vector.extract_strided_slice %7 {offsets = [8, 0], sizes = [8, 128], strides = [1, 1]} : vector<16x128xf32> to vector<8x128xf32>
    %cst_9 = arith.constant dense<0.000000e+00> : vector<8x8xf32>
    %31 = tpu.matmul %28, %29, %cst_9 {dimension_numbers = #tpu.dot_dimension_numbers<[1], [1], [0], [0], [0, 0, 1, 0], [], []>} : vector<8x128xf32>, vector<8x128xf32>, vector<8x8xf32> -> vector<8x8xf32>
    %cst_10 = arith.constant -1.000000e+30 : f32
    %32 = vector.broadcast %cst_10 : f32 to vector<8x8xf32>
    %33 = arith.select %10, %31, %32 : vector<8x8xi1>, vector<8x8xf32>
    %cst_11 = arith.constant dense<0xFF800000> : vector<8xf32>
    %34 = vector.multi_reduction <maximumf>, %33, %cst_11 [1] : vector<8x8xf32> to vector<8xf32>
    %35 = vector.shape_cast %34 : vector<8xf32> to vector<8x1xf32>
    %36 = vector.broadcast %35 : vector<8x1xf32> to vector<8x8xf32>
    %37 = arith.subf %33, %36 : vector<8x8xf32>
    %38 = math.exp %37 : vector<8x8xf32>
    %cst_12 = arith.constant dense<0.000000e+00> : vector<8xf32>
    %39 = vector.multi_reduction <add>, %38, %cst_12 [1] : vector<8x8xf32> to vector<8xf32>
    %40 = vector.shape_cast %39 : vector<8xf32> to vector<8x1xf32>
    %41 = tpu.reciprocal %40 : vector<8x1xf32> -> vector<8x1xf32>
    %42 = vector.broadcast %41 : vector<8x1xf32> to vector<8x8xf32>
    %43 = arith.mulf %38, %42 : vector<8x8xf32>
    %cst_13 = arith.constant dense<0.000000e+00> : vector<8x128xf32>
    %44 = tpu.matmul %43, %30, %cst_13 {dimension_numbers = #tpu.dot_dimension_numbers<[1], [0], [0], [1], [0, 0, 1, 1], [], []>} : vector<8x8xf32>, vector<8x128xf32>, vector<8x128xf32> -> vector<8x128xf32>
    %45 = tpu.concatenate %27, %44 in 0 : vector<8x128xf32>, vector<8x128xf32> -> vector<16x128xf32>
    %c0_14 = arith.constant 0 : index
    %c0_15 = arith.constant 0 : index
    %46 = vector.load %arg2[%c0_14, %c0_15] : memref<16x128xf32, #tpu.memory_space<vmem>>, vector<16x128xf32>
    tpu.vector_store %arg2[%c0_14, %c0_15], %45 {strides = array<i32>} : memref<16x128xf32, #tpu.memory_space<vmem>>, vector<16x128xf32>,
    return
  }
}

</mosaic_0001>

<llo_original>
// kernel: head_forward.1
$region0: #{head_forward.1}
  #allocation0 [shape = 'u32[]', space=smem, size = 0x4, offset = 0x4, fixed_abs, tag = 'smem constant byte address 0x4 - core index']
  #allocation1 [shape = 'u32[72,128]{1,0:T(1,128)}', space=vmem, size = 0x9000, scoped, tag = 'internal scratch']
  %s0 = inlined_call_operand.hbm [shape: f32[16,32], index: 0, kind: input, shape index: {}]
  %s1 = inlined_call_operand.hbm [shape: f32[32,384], index: 1, kind: input, shape index: {}]
  %s2 = inlined_call_operand.vmem [shape: f32[16,128], index: 2, kind: output, shape index: {}]
  %s3 = sld [smem:[#allocation0]]
  $region26: #{head_forward.1} parent=0
    _
  %s5 = ssub.s32 1, %s3
  %s6 = scalar_select 0, %s5, %s3
  $region1: #{head_forward.1} parent=0
    #allocation2 [shape = 'u8[8192]{0}', space=vmem, size = 0x2000, scoped, tag = 'input window, operand 0, single buffered']
    #allocation3 [shape = 's32[1]{0}', space=sflag, size = 0x4, scoped, tag = 'scoped memory for head_forward.1']
    #allocation4 [shape = 'u8[49152]{0}', space=vmem, size = 0xc000, scoped, tag = 'input window, operand 1, single buffered']
    #allocation5 [shape = 's32[1]{0}', space=sflag, size = 0x4, scoped, tag = 'scoped memory for head_forward.1']
    %7 = vsyncpa [#allocation3], 0
    %8 = vsyncpa [#allocation5], 0
    // Predicated region
    $region2: #{head_forward.1} parent=1 // pred_check
      _
    $region3: #{head_forward.1} parent=1 // pred_check_branch
      %10 = sbr.rel (0) target = $region5
    $region4: #{head_forward.1} parent=1 // pred_region
      %12 = vsyncadd [#allocation3], 0
      %s13 = sshll.u32 %s0, 4
      %s14 = int_to_ptr.hbm [resolvable:$true] %s13
      %s15 = sshll.u32 [#allocation2], 4
      %s16 = int_to_ptr.vmem [resolvable:$true] %s15
      %21 = dma.hbm_to_vmem [thread:$0]  %s14, 256, %s16, [#allocation3], 128, 128, 8
    $region5: #{head_forward.1} parent=1 // pred_fallthru
      _
    // Predicated region
    $region6: #{head_forward.1} parent=1 // pred_check
      _
    $region7: #{head_forward.1} parent=1 // pred_check_branch
      %23 = sbr.rel (0) target = $region9
    $region8: #{head_forward.1} parent=1 // pred_region
      %25 = vsyncadd [#allocation5], 0
      %s26 = sshll.u32 %s1, 4
      %s27 = int_to_ptr.hbm [resolvable:$true] %s26
      %s28 = sshll.u32 [#allocation4], 4
      %s29 = int_to_ptr.vmem [resolvable:$true] %s28
      %34 = dma.hbm_to_vmem [thread:$0]  %s27, 1536, %s29, [#allocation5], 384, 384, 24
    $region9: #{head_forward.1} parent=1 // pred_fallthru
      _
    // Predicated region
    $region10: #{head_forward.1} parent=1 // pred_check
      _
    $region11: #{head_forward.1} parent=1 // pred_check_branch
      %36 = sbr.rel (0) target = $region13
    $region12: #{head_forward.1} parent=1 // pred_region
      %38 = dma.done [#allocation3], 256
    $region13: #{head_forward.1} parent=1 // pred_fallthru
      _
    // Predicated region
    $region14: #{head_forward.1} parent=1 // pred_check
      _
    $region15: #{head_forward.1} parent=1 // pred_check_branch
      %40 = sbr.rel (0) target = $region17
    $region16: #{head_forward.1} parent=1 // pred_region
      %42 = dma.done [#allocation5], 1536
    $region17: #{head_forward.1} parent=1 // pred_fallthru
      _
    %v43 = vld [vmem:[#allocation2] sm:$0xff]
    %v44 = vld [vmem:[#allocation2 + $0x8] sm:$0xff]
    %v45 = vld [vmem:[#allocation4] sm:$0xff]
    %v46 = vld [vmem:[#allocation4 + $0x8] sm:$0xff]
    %v47 = vld [vmem:[#allocation4 + $0x10] sm:$0xff]
    %v48 = vld [vmem:[#allocation4 + $0x18] sm:$0xff]
    %v49 = vld [vmem:[#allocation4 + $0x20] sm:$0xff]
    %v50 = vld [vmem:[#allocation4 + $0x28] sm:$0xff]
    %v51 = vld [vmem:[#allocation4 + $0x30] sm:$0xff]
    %v52 = vld [vmem:[#allocation4 + $0x38] sm:$0xff]
    %v53 = vld [vmem:[#allocation4 + $0x40] sm:$0xff]
    %v54 = vld [vmem:[#allocation4 + $0x48] sm:$0xff]
    %v55 = vld [vmem:[#allocation4 + $0x50] sm:$0xff]
    %v56 = vld [vmem:[#allocation4 + $0x58] sm:$0xff]
    %vm57 = vcmask 261120
    %v59 = vsel %vm57, %v43, 0
    %v62 = vsel %vm57, %v44, 0
    %64 = vmatpush.msra.mxu0 0.0
    %65 = vmatpush.msra.mxu0 0.0
    %66 = vmatpush.msra.mxu0 0.0
    %67 = vmatpush.msra.mxu0 0.0
    %68 = vmatpush.msra.mxu0 0.0
    %69 = vmatpush.msra.mxu0 0.0
    %70 = vmatpush.msra.mxu0 0.0
    %71 = vmatpush.msra.mxu0 0.0
    %72 = vmatpush.msra.mxu0 0.0
    %73 = vmatpush.msra.mxu0 0.0
    %74 = vmatpush.msra.mxu0 0.0
    %75 = vmatpush.msra.mxu0 0.0
    %76 = vmatpush.msra.mxu0 %v54
    %77 = vmatpush.msra.mxu0 %v51
    %78 = vmatpush.msra.mxu0 %v48
    %79 = vmatpush.msra.mxu0 %v45
    %80 = vmatmul.f32.gmra.mxu0 %v59
    %v81 = vpop.f32.mrf.mxu0
    %v82 = vadd.f32 0.0, %v81
    %83 = vmatmul.f32.gmra.mxu0 %v62
    %v84 = vpop.f32.mrf.mxu0
    %v85 = vadd.f32 0.0, %v84
    %86 = vdwg.mxu0
    %87 = vmatpush.msra.mxu0 0.0
    %88 = vmatpush.msra.mxu0 0.0
    %89 = vmatpush.msra.mxu0 0.0
    %90 = vmatpush.msra.mxu0 0.0
    %91 = vmatpush.msra.mxu0 0.0
    %92 = vmatpush.msra.mxu0 0.0
    %93 = vmatpush.msra.mxu0 0.0
    %94 = vmatpush.msra.mxu0 0.0
    %95 = vmatpush.msra.mxu0 0.0
    %96 = vmatpush.msra.mxu0 0.0
    %97 = vmatpush.msra.mxu0 0.0
    %98 = vmatpush.msra.mxu0 0.0
    %99 = vmatpush.msra.mxu0 %v55
    %100 = vmatpush.msra.mxu0 %v52
    %101 = vmatpush.msra.mxu0 %v49
    %102 = vmatpush.msra.mxu0 %v46
    %103 = vmatmul.f32.gmra.mxu0 %v59
    %v104 = vpop.f32.mrf.mxu0
    %v105 = vadd.f32 0.0, %v104
    %106 = vmatmul.f32.gmra.mxu0 %v62
    %v107 = vpop.f32.mrf.mxu0
    %v108 = vadd.f32 0.0, %v107
    %109 = vdwg.mxu0
    %110 = vmatpush.msra.mxu0 0.0
    %111 = vmatpush.msra.mxu0 0.0
    %112 = vmatpush.msra.mxu0 0.0
    %113 = vmatpush.msra.mxu0 0.0
    %114 = vmatpush.msra.mxu0 0.0
    %115 = vmatpush.msra.mxu0 0.0
    %116 = vmatpush.msra.mxu0 0.0
    %117 = vmatpush.msra.mxu0 0.0
    %118 = vmatpush.msra.mxu0 0.0
    %119 = vmatpush.msra.mxu0 0.0
    %120 = vmatpush.msra.mxu0 0.0
    %121 = vmatpush.msra.mxu0 0.0
    %122 = vmatpush.msra.mxu0 %v56
    %123 = vmatpush.msra.mxu0 %v53
    %124 = vmatpush.msra.mxu0 %v50
    %125 = vmatpush.msra.mxu0 %v47
    %126 = vmatmul.f32.gmra.mxu0 %v59
    %v127 = vpop.f32.mrf.mxu0
    %v128 = vadd.f32 0.0, %v127
    %129 = vmatmul.f32.gmra.mxu0 %v62
    %v130 = vpop.f32.mrf.mxu0
    %v131 = vadd.f32 0.0, %v130
    %132 = vdwg.mxu0
    %v133 = vmul.f32 %v82, 0.35355338
    %v134 = vmul.f32 %v85, 0.35355338
    %v135 = vlaneseq
    %v136 = vshrl.u32 %v135, 7
    %v137 = vlaneseq
    %v138 = vand.u32 %v137, 127
    %vm139 = vcmp.ge.s32.totalorder %v136, %v138
    %140 = vmatpush.xpose.msra.mxu0 0.0
    %141 = vmatpush.xpose.msra.mxu0 0.0
    %142 = vmatpush.xpose.msra.mxu0 0.0
    %143 = vmatpush.xpose.msra.mxu0 0.0
    %144 = vmatpush.xpose.msra.mxu0 0.0
    %145 = vmatpush.xpose.msra.mxu0 0.0
    %146 = vmatpush.xpose.msra.mxu0 0.0
    %147 = vmatpush.xpose.msra.mxu0 0.0
    %148 = vmatpush.xpose.msra.mxu0 0.0
    %149 = vmatpush.xpose.msra.mxu0 0.0
    %150 = vmatpush.xpose.msra.mxu0 0.0
    %151 = vmatpush.xpose.msra.mxu0 0.0
    %152 = vmatpush.xpose.msra.mxu0 0.0
    %153 = vmatpush.xpose.msra.mxu0 0.0
    %154 = vmatpush.xpose.msra.mxu0 0.0
    %155 = vmatpush.xpose.msra.mxu0 %v105
    %156 = vmatmul.f32.gmra.mxu0 %v133
    %v157 = vpop.f32.mrf.mxu0
    %v158 = vadd.f32 0.0, %v157
    %159 = vdwg.mxu0
    %v160 = vsel %vm139, %v158, -1e+30
    %vm161 = vcmask 64512
    %v162 = vsel %vm161, %v160, -inf
    %163 = vmax.xlane.f32.xlu0 %v162
    %v164 = vpop.xlane.xlu0 %163
    %v165 = vsub.f32 %v160, %v164
    %v166 = vmul.f32 %v165, 1.442695
    %v167 = vpow.pop %v166
    %v168 = vsel %vm161, %v167, 0.0
    %169 = vadd.xlane.f32.xlu0 %v168
    %v170 = vpop.xlane.xlu0 %169
    %v171 = vrcp.pop %v170
    %v172 = vmul.f32 %v170, %v171
    %v173 = vsub.f32 1.0, %v172
    %v174 = vmul.f32 %v171, %v173
    %v175 = vadd.f32 %v171, %v174
    %vm176 = vweird.f32 %v170
    %vm177 = vweird.f32 %v171
    %vm178 = vmor %vm176, %vm177
    %v179 = vsel %vm178, %v171, %v175
    %v180 = vand.u32 2147483647, %v170
    %vm181 = vcmp.eq.f32.partialorder %v180, 8.507059e+37
    %v182 = vand.u32 %v170, 2147483648
    %v183 = vor.u32 1.1754944e-38, %v182
    %v184 = vsel %vm181, %v183, %v179
    %v185 = vmul.f32 %v167, %v184
    %v187 = vsel %vm161, %v185, 0
    %189 = vmatpush.msra.mxu0 0.0
    %190 = vmatpush.msra.mxu0 0.0
    %191 = vmatpush.msra.mxu0 0.0
    %192 = vmatpush.msra.mxu0 0.0
    %193 = vmatpush.msra.mxu0 0.0
    %194 = vmatpush.msra.mxu0 0.0
    %195 = vmatpush.msra.mxu0 0.0
    %196 = vmatpush.msra.mxu0 0.0
    %197 = vmatpush.msra.mxu0 0.0
    %198 = vmatpush.msra.mxu0 0.0
    %199 = vmatpush.msra.mxu0 0.0
    %200 = vmatpush.msra.mxu0 0.0
    %201 = vmatpush.msra.mxu0 0.0
    %202 = vmatpush.msra.mxu0 0.0
    %203 = vmatpush.msra.mxu0 0.0
    %204 = vmatpush.msra.mxu0 %v128
    %205 = vmatmul.f32.gmra.mxu0 %v187
    %v206 = vpop.f32.mrf.mxu0
    %v207 = vadd.f32 0.0, %v206
    %208 = vdwg.mxu0
    %209 = vmatpush.xpose.msra.mxu0 0.0
    %210 = vmatpush.xpose.msra.mxu0 0.0
    %211 = vmatpush.xpose.msra.mxu0 0.0
    %212 = vmatpush.xpose.msra.mxu0 0.0
    %213 = vmatpush.xpose.msra.mxu0 0.0
    %214 = vmatpush.xpose.msra.mxu0 0.0
    %215 = vmatpush.xpose.msra.mxu0 0.0
    %216 = vmatpush.xpose.msra.mxu0 0.0
    %217 = vmatpush.xpose.msra.mxu0 0.0
    %218 = vmatpush.xpose.msra.mxu0 0.0
    %219 = vmatpush.xpose.msra.mxu0 0.0
    %220 = vmatpush.xpose.msra.mxu0 0.0
    %221 = vmatpush.xpose.msra.mxu0 0.0
    %222 = vmatpush.xpose.msra.mxu0 0.0
    %223 = vmatpush.xpose.msra.mxu0 0.0
    %224 = vmatpush.xpose.msra.mxu0 %v108
    %225 = vmatmul.f32.gmra.mxu0 %v134
    %v226 = vpop.f32.mrf.mxu0
    %v227 = vadd.f32 0.0, %v226
    %228 = vdwg.mxu0
    %v229 = vsel %vm139, %v227, -1e+30
    %v230 = vsel %vm161, %v229, -inf
    %231 = vmax.xlane.f32.xlu0 %v230
    %v232 = vpop.xlane.xlu0 %231
    %v233 = vsub.f32 %v229, %v232
    %v234 = vmul.f32 %v233, 1.442695
    %v235 = vpow.pop %v234
    %v236 = vsel %vm161, %v235, 0.0
    %237 = vadd.xlane.f32.xlu0 %v236
    %v238 = vpop.xlane.xlu0 %237
    %v239 = vrcp.pop %v238
    %v240 = vmul.f32 %v238, %v239
    %v241 = vsub.f32 1.0, %v240
    %v242 = vmul.f32 %v239, %v241
    %v243 = vadd.f32 %v239, %v242
    %vm244 = vweird.f32 %v238
    %vm245 = vweird.f32 %v239
    %vm246 = vmor %vm244, %vm245
    %v247 = vsel %vm246, %v239, %v243
    %v248 = vand.u32 2147483647, %v238
    %vm249 = vcmp.eq.f32.partialorder %v248, 8.507059e+37
    %v250 = vand.u32 %v238, 2147483648
    %v251 = vor.u32 1.1754944e-38, %v250
    %v252 = vsel %vm249, %v251, %v247
    %v253 = vmul.f32 %v235, %v252
    %v255 = vsel %vm161, %v253, 0
    %257 = vmatpush.msra.mxu0 0.0
    %258 = vmatpush.msra.mxu0 0.0
    %259 = vmatpush.msra.mxu0 0.0
    %260 = vmatpush.msra.mxu0 0.0
    %261 = vmatpush.msra.mxu0 0.0
    %262 = vmatpush.msra.mxu0 0.0
    %263 = vmatpush.msra.mxu0 0.0
    %264 = vmatpush.msra.mxu0 0.0
    %265 = vmatpush.msra.mxu0 0.0
    %266 = vmatpush.msra.mxu0 0.0
    %267 = vmatpush.msra.mxu0 0.0
    %268 = vmatpush.msra.mxu0 0.0
    %269 = vmatpush.msra.mxu0 0.0
    %270 = vmatpush.msra.mxu0 0.0
    %271 = vmatpush.msra.mxu0 0.0
    %272 = vmatpush.msra.mxu0 %v131
    %273 = vmatmul.f32.gmra.mxu0 %v255
    %v274 = vpop.f32.mrf.mxu0
    %v275 = vadd.f32 0.0, %v274
    %276 = vdwg.mxu0
    %277 = vst [vmem:[%s2] sm:$0xff] %v207
    %278 = vst [vmem:[%s2 + $0x8] sm:$0xff] %v275
    // Predicated region
    $region18: #{head_forward.1} parent=1 // pred_check
      _
    $region19: #{head_forward.1} parent=1 // pred_check_branch
      %280 = sbr.rel (0) target = $region21
    $region20: #{head_forward.1} parent=1 // pred_region
      _
    $region21: #{head_forward.1} parent=1 // pred_fallthru
      _
    // Predicated region
    $region22: #{head_forward.1} parent=1 // pred_check
      _
    $region23: #{head_forward.1} parent=1 // pred_check_branch
      %282 = sbr.rel (0) target = $region25
    $region24: #{head_forward.1} parent=1 // pred_region
      _
    $region25: #{head_forward.1} parent=1 // pred_fallthru
      _
    %283 = vsyncpa [#allocation3], 1
    %284 = vsyncpa [#allocation5], 1

</llo_original>
